<compile_context>
chip_gen: v7x
topology: tpu7x:2x2x1
jax: 0.10.0
libtpu: 0.0.40
codegen_flags: <defaults>
</compile_context>

<pallas_src>
import functools
import math

import jax
import jax.numpy as jnp
from jax.experimental import pallas as pl
from jax.experimental.pallas import tpu as pltpu


@functools.lru_cache(maxsize=None)
def _roll_matches_numpy() -> bool:
    """One-time probe: does pltpu.roll follow np.roll's shift direction?"""
    def probe(x_ref, o_ref):
        o_ref[...] = pltpu.roll(x_ref[...], 1, 1)

    x = jnp.tile(jnp.arange(128, dtype=jnp.float32)[None, :], (8, 1))
    y = pl.pallas_call(probe, out_shape=jax.ShapeDtypeStruct((8, 128), jnp.float32))(x)
    return bool(y[0, 1] == 0.0)  # np.roll(row, 1)[1] == row[0] == 0


def har_kernel(x_ref, w1_ref, b1_ref, w2_ref, b2_ref, w3_ref, b3_ref,
               mprev_ref, mnext_ref, sel_ref, o_ref,
               *, shift_prev, shift_next, compute_dtype):
    # Per grid step (T = batch_tile * seq lanes):
    #   x_ref: (C_pad, T) cdt   w1_ref: (64, 3*C_pad) cdt   b1_ref: (64, 1) f32
    #   w2_ref: (64, 192) cdt   b2_ref: (64, 1) f32
    #   w3_ref: (C, 64) cdt (pre-scaled by 1/pool_len)       b3_ref: (C, 1) f32
    #   mprev_ref/mnext_ref: (1, T) f32 border masks (hoisted, VMEM-resident)
    #   sel_ref: (T, batch_tile) cdt 0/1 GAP selection (hoisted, VMEM-resident)
    #   o_ref:   (C, batch_tile) f32
    f32 = jnp.float32
    cdt = compute_dtype

    x = x_ref[...].astype(f32)
    mprev = mprev_ref[...]          # zero out a[t-1] at each sample's first position
    mnext = mnext_ref[...]          # zero out a[t+1] at each sample's last position

    def taps(a):
        # (C, T) f32 -> (3C, T) cdt: rows [a[t-1]; a[t]; a[t+1]] with per-sample zero
        # padding at the borders (masks kill wrapped / cross-sample values).
        prev = pltpu.roll(a, shift_prev, 1) * mprev
        nxt = pltpu.roll(a, shift_next, 1) * mnext
        return jnp.concatenate([prev, a, nxt], axis=0).astype(cdt)

    # ---- Conv1d(C_in -> 64, k=3, pad=1) + ReLU, fused into one MXU matmul ----
    # TODO(synk): nn.Dropout(0.5) is identity at inference; training-mode dropout omitted.
    y = jnp.dot(w1_ref[...], taps(x), preferred_element_type=f32) + b1_ref[...]
    y = jnp.maximum(y, 0.0)                                   # (64, T) f32

    # ---- Conv1d(64 -> 64, k=3, pad=1) + ReLU, fused (K = 192) ----
    y2 = jnp.dot(w2_ref[...], taps(y), preferred_element_type=f32) + b2_ref[...]
    y2 = jnp.maximum(y2, 0.0)                                 # (64, T) f32

    # ---- MaxPool1d(2): pairwise max lands on even within-sample positions.  The last
    #      position of each sample reads across the boundary, but sel never selects it.
    m = jnp.maximum(y2, pltpu.roll(y2, shift_next, 1))        # (64, T) f32

    # ---- Reassociated head: Linear(64->C) first, then GAP selection/average ----
    #   z = (w3 / pool_len) @ m : (C, 64) @ (64, T) -> (C, T)
    #   o = z @ sel + b3        : (C, T) @ (T, B)  -> (C, B)
    z = jnp.dot(w3_ref[...], m.astype(cdt), preferred_element_type=f32)
    o_ref[...] = (jnp.dot(z.astype(cdt), sel_ref[...], preferred_element_type=f32)
                  + b3_ref[...])


def _pick_batch_tile(n, seq, itemsize, *, lane_cap=8192, sel_cap_bytes=8 << 20):
    # Smallest granule keeping the flattened lane width a multiple of 128 and the batch
    # granule a multiple of 8, grown to amortize the ~0.35us/step overhead while keeping
    # (a) the per-step lane width and (b) the VMEM-resident GAP selection matrix
    # (tile^2 * seq * itemsize bytes) inside a budget that fits every generation
    # (v7x: 64 MiB per TensorCore, vmem_limit_bytes set to 48 MiB below).
    base = max(8, 128 // math.gcd(seq, 128))
    n_base = pl.cdiv(n, base) * base
    tile = base

    def fits(t):
        return (t <= n_base
                and t * seq <= lane_cap
                and t * t * seq * itemsize <= sel_cap_bytes)

    while fits(tile * 2):
        tile *= 2
    # Keep >= 2 grid blocks when the batch allows it so dimension_semantics=("parallel",)
    # can shard grid steps across both TensorCores on v7x (harmless on v5e/v6e).
    if tile == n_base and tile > base:
        tile //= 2
    return tile


def har_forward(x, params, *, batch_tile=None, use_bf16=True):
    """x: (N, C_in, L) float; params: HAR_model weights. Returns logits (N, num_classes)."""
    n, c_in, seq = x.shape
    assert seq >= 2, "MaxPool1d(2) followed by AdaptiveAvgPool1d(1) needs seq >= 2"
    w1, b1, w2, b2, w3t, b3 = (params["w1"], params["b1"], params["w2"],
                               params["b2"], params["w3t"], params["b3"])
    num_classes = w3t.shape[1]
    cdt = jnp.bfloat16 if use_bf16 else jnp.float32
    itemsize = jnp.dtype(cdt).itemsize

    if batch_tile is None:
        batch_tile = _pick_batch_tile(n, seq, itemsize)
    n_pad = pl.cdiv(n, batch_tile) * batch_tile
    c_pad = pl.cdiv(c_in, 8) * 8
    t_lanes = batch_tile * seq
    num_blocks = n_pad // batch_tile
    pool_len = seq // 2

    # ---- Layout plumbing (plain XLA): channels on sublanes, (sample, position)
    #      flattened onto lanes; cast to the matmul compute dtype to halve the x DMA.
    xf = jnp.pad(x.astype(jnp.float32), ((0, n_pad - n), (0, c_pad - c_in), (0, 0)))
    x_flat = jnp.transpose(xf, (1, 0, 2)).reshape(c_pad, n_pad * seq).astype(cdt)

    # ---- Weight prep (all grid-invariant, hoisted into the wrapper) ----
    w1p = jnp.pad(w1.astype(jnp.float32), ((0, 0), (0, 0), (0, c_pad - c_in)))
    w1f = jnp.concatenate([w1p[0], w1p[1], w1p[2]], axis=1).astype(cdt)     # (64, 3*c_pad)
    w2f = jnp.concatenate([w2[0], w2[1], w2[2]], axis=1).astype(cdt)        # (64, 192)
    w3s = (w3t.T.astype(jnp.float32) / float(pool_len)).astype(cdt)         # (C, 64), GAP scale folded in
    b3c = b3.reshape(num_classes, 1).astype(jnp.float32)                    # (C, 1)

    # ---- Grid-invariant border masks & GAP selection matrix (DMA'd once, resident) ----
    q = jnp.arange(t_lanes, dtype=jnp.int32) % seq
    mprev = (q > 0).astype(jnp.float32)[None, :]           # a[t-1] exists inside the sample
    mnext = (q < seq - 1).astype(jnp.float32)[None, :]     # a[t+1] exists inside the sample
    lane = jnp.arange(t_lanes, dtype=jnp.int32)
    col = jnp.arange(batch_tile, dtype=jnp.int32)
    sel = ((lane[:, None] // seq == col[None, :])
           & (q[:, None] % 2 == 0)
           & (q[:, None] < 2 * pool_len)).astype(cdt)      # (T, B) 0/1 selection

    if _roll_matches_numpy():
        shift_prev, shift_next = 1, t_lanes - 1            # roll right / roll left by one lane
    else:
        shift_prev, shift_next = t_lanes - 1, 1

    kernel = functools.partial(har_kernel, shift_prev=shift_prev,
                               shift_next=shift_next, compute_dtype=cdt)

    flops = 2 * (n_pad * seq) * (64 * 3 * c_pad + 64 * 192
                                 + num_classes * 64 + num_classes * batch_tile)
    bytes_accessed = (x_flat.size * itemsize
                      + (w1f.size + w2f.size + w3s.size + sel.size) * itemsize
                      + (b1.size + b2.size + b3.size + 2 * t_lanes) * 4
                      + num_blocks * num_classes * batch_tile * 4)

    out = pl.pallas_call(
        kernel,
        out_shape=jax.ShapeDtypeStruct((num_blocks, num_classes, batch_tile), jnp.float32),
        grid=(num_blocks,),
        in_specs=[
            pl.BlockSpec((c_pad, t_lanes), lambda i: (0, i)),        # x: B_tile samples/step
            pl.BlockSpec((64, 3 * c_pad), lambda i: (0, 0)),         # fused W1
            pl.BlockSpec((64, 1), lambda i: (0, 0)),                 # b1
            pl.BlockSpec((64, 192), lambda i: (0, 0)),               # fused W2
            pl.BlockSpec((64, 1), lambda i: (0, 0)),                 # b2
            pl.BlockSpec((num_classes, 64), lambda i: (0, 0)),       # W3 (pre-scaled)
            pl.BlockSpec((num_classes, 1), lambda i: (0, 0)),        # b3
            pl.BlockSpec((1, t_lanes), lambda i: (0, 0)),            # has_prev mask
            pl.BlockSpec((1, t_lanes), lambda i: (0, 0)),            # has_next mask
            pl.BlockSpec((t_lanes, batch_tile), lambda i: (0, 0)),   # GAP selection
        ],
        out_specs=pl.BlockSpec((None, num_classes, batch_tile), lambda i: (i, 0, 0)),
        compiler_params=pltpu.CompilerParams(
            dimension_semantics=("parallel",),               # batch blocks shard across TCs
            vmem_limit_bytes=48 * 1024 * 1024),
        cost_estimate=pl.CostEstimate(flops=int(flops), transcendentals=0,
                                      bytes_accessed=int(bytes_accessed)),
    )(x_flat, w1f, b1.astype(jnp.float32), w2f, b2.astype(jnp.float32),
      w3s, b3c, mprev, mnext, sel)

    # (num_blocks, num_classes, B_tile) -> (N, num_classes)
    return jnp.swapaxes(out, 1, 2).reshape(n_pad, num_classes)[:n]


def ref_forward(x, params):
    """Pure-JAX reference matching PyTorch semantics (inference mode)."""
    w1, b1, w2, b2, w3t, b3 = (params["w1"], params["b1"], params["w2"],
                               params["b2"], params["w3t"], params["b3"])
    x = x.astype(jnp.float32)

    def conv1d_p1(xin, w, b):   # w: (3, C_out, C_in), b: (C_out, 1)
        s = xin.shape[-1]
        xp = jnp.pad(xin, ((0, 0), (0, 0), (1, 1)))
        y = sum(jnp.einsum("oc,ncl->nol", w[k], xp[:, :, k:k + s]) for k in range(3))
        return y + b.reshape(1, -1, 1)

    y = jax.nn.relu(conv1d_p1(x, w1, b1))
    y = jax.nn.relu(conv1d_p1(y, w2, b2))
    nb, ch, s = y.shape
    y = y[..., :2 * (s // 2)].reshape(nb, ch, s // 2, 2).max(-1)   # MaxPool1d(2)
    gap = y.mean(-1)                                               # AdaptiveAvgPool1d(1)+Flatten
    return gap @ w3t + b3                                          # Linear(64, num_classes)


if __name__ == "__main__":
    # Small shapes consistent with the module: batch=2, input_size(C_in)=4,
    # sequence length L=16, num_classes=6.
    N, C_IN, L, NUM_CLASSES = 2, 4, 16, 6

    key = jax.random.PRNGKey(0)
    keys = jax.random.split(key, 8)
    params = {
        "w1": 0.1 * jax.random.normal(keys[0], (3, 64, C_IN), jnp.float32),
        "b1": 0.1 * jax.random.normal(keys[1], (64, 1), jnp.float32),
        "w2": 0.1 * jax.random.normal(keys[2], (3, 64, 64), jnp.float32),
        "b2": 0.1 * jax.random.normal(keys[3], (64, 1), jnp.float32),
        "w3t": 0.1 * jax.random.normal(keys[4], (64, NUM_CLASSES), jnp.float32),
        "b3": 0.1 * jax.random.normal(keys[5], (1, NUM_CLASSES), jnp.float32),
    }
    x = jax.random.normal(keys[6], (N, C_IN, L), jnp.float32)

    ref = jax.block_until_ready(ref_forward(x, params))

    # Strict check: f32 MXU path against the f32 reference.
    out_f32 = jax.block_until_ready(har_forward(x, params, use_bf16=False))
    assert out_f32.shape == (N, NUM_CLASSES), out_f32.shape
    assert jnp.allclose(out_f32, ref, rtol=1e-4, atol=1e-4), (out_f32, ref)

    # Fast path (default): bf16 MXU operands, f32 accumulation; looser tolerance.
    out_bf16 = jax.block_until_ready(har_forward(x, params, use_bf16=True))
    assert out_bf16.shape == (N, NUM_CLASSES), out_bf16.shape
    assert jnp.allclose(out_bf16, ref, rtol=3e-2, atol=3e-2), (out_bf16, ref)

    print("KERNEL_OK")
</pallas_src>

<mosaic_0001>
module attributes {stable_mosaic.version = 11 : i64} {
  func.func @probe(%arg0: memref<8x128xf32, #tpu.memory_space<vmem>>, %arg1: memref<8x128xf32, #tpu.memory_space<vmem>>) attributes {dimension_semantics = [], scalar_prefetch = 0 : i64, scratch_operands = 0 : i64, tpu.core_type = #tpu.core_type<tc>} {
    %c0 = arith.constant 0 : index
    %c0_0 = arith.constant 0 : index
    %0 = vector.load %arg0[%c0, %c0_0] : memref<8x128xf32, #tpu.memory_space<vmem>>, vector<8x128xf32>
    %c1_i32 = arith.constant 1 : i32
    %1 = tpu.dynamic_rotate %0 by %c1_i32 dim 1 : vector<8x128xf32>, i32 -> vector<8x128xf32>
    %c0_1 = arith.constant 0 : index
    %c0_2 = arith.constant 0 : index
    %2 = vector.load %arg1[%c0_1, %c0_2] : memref<8x128xf32, #tpu.memory_space<vmem>>, vector<8x128xf32>
    tpu.vector_store %arg1[%c0_1, %c0_2], %1 {strides = array<i32>} : memref<8x128xf32, #tpu.memory_space<vmem>>, vector<8x128xf32>,
    return
  }
}

</mosaic_0001>

<llo_original>
// kernel: tpu_custom_call.1
$region0: #{tpu_custom_call.1}
  #allocation0 [shape = 'u32[]', space=smem, size = 0x4, offset = 0x4, fixed_abs, tag = 'smem constant byte address 0x4 - core index']
  #allocation1 [shape = 'u32[144,128]{1,0:T(1,128)}', space=vmem, size = 0x12000, scoped, tag = 'internal scratch']
  %s0 = inlined_call_operand.hbm [shape: f32[8,128], index: 0, kind: input, shape index: {}]
  %s1 = inlined_call_operand.hbm [shape: f32[8,128], index: 1, kind: output, shape index: {}]
  %s2 = sld [smem:[#allocation0]]
  $region18: #{tpu_custom_call.1} parent=0
    _
  %s4 = ssub.s32 1, %s2
  %s5 = scalar_select 0, %s4, %s2
  $region1: #{tpu_custom_call.1} parent=0
    #allocation2 [shape = 'u8[4096]{0}', space=vmem, size = 0x1000, scoped, tag = 'input window, operand 0, single buffered']
    #allocation3 [shape = 's32[1]{0}', space=sflag, size = 0x4, scoped, tag = 'scoped memory for tpu_custom_call.1']
    #allocation4 [shape = 's32[1]{0}', space=sflag, size = 0x4, scoped, tag = 'scoped memory for tpu_custom_call.1']
    #allocation5 [shape = 'u8[4096]{0}', space=vmem, size = 0x1000, scoped, tag = 'output window, operand 0, single buffered']
    %6 = vsyncpa [#allocation3], 0
    %7 = vsyncpa [#allocation4], 0
    // Predicated region
    $region2: #{tpu_custom_call.1} parent=1 // pred_check
      _
    $region3: #{tpu_custom_call.1} parent=1 // pred_check_branch
      %9 = sbr.rel (0) target = $region5
    $region4: #{tpu_custom_call.1} parent=1 // pred_region
      %s11 = ssub.s32 128, 128
      %12 = vsyncadd [#allocation3], %s11
      %s14 = sshll.u32 [#allocation2], 4
      %s15 = int_to_ptr.vmem [resolvable:$true] %s14
      %17 = dma.hbm_to_vmem [thread:$0]  %s0, 128, %s15, [#allocation3]
    $region5: #{tpu_custom_call.1} parent=1 // pred_fallthru
      _
    // Predicated region
    $region6: #{tpu_custom_call.1} parent=1 // pred_check
      _
    $region7: #{tpu_custom_call.1} parent=1 // pred_check_branch
      %19 = sbr.rel (0) target = $region9
    $region8: #{tpu_custom_call.1} parent=1 // pred_region
      %20 = dma.done [#allocation3], 128
    $region9: #{tpu_custom_call.1} parent=1 // pred_fallthru
      _
    %v21 = vld [vmem:[#allocation2] sm:$0xff]
    %22 = vrot.lane.b32.xlu0 %v21, 1
    %v23 = vpop.permute.xlu0 %22
    %24 = vst [vmem:[#allocation5] sm:$0xff] %v23
    // Predicated region
    $region10: #{tpu_custom_call.1} parent=1 // pred_check
      _
    $region11: #{tpu_custom_call.1} parent=1 // pred_check_branch
      %26 = sbr.rel (0) target = $region13
    $region12: #{tpu_custom_call.1} parent=1 // pred_region
      %s28 = ssub.s32 128, 128
      %29 = vsyncadd [#allocation4], %s28
      %s31 = sshll.u32 [#allocation5], 4
      %s32 = int_to_ptr.vmem [resolvable:$true] %s31
      %34 = dma.vmem_to_hbm [thread:$0]  %s32, 128, %s1, [#allocation4]
    $region13: #{tpu_custom_call.1} parent=1 // pred_fallthru
      _
    // Predicated region
    $region14: #{tpu_custom_call.1} parent=1 // pred_check
      _
    $region15: #{tpu_custom_call.1} parent=1 // pred_check_branch
      %36 = sbr.rel (0) target = $region17
    $region16: #{tpu_custom_call.1} parent=1 // pred_region
      %37 = dma.done [#allocation4], 128
    $region17: #{tpu_custom_call.1} parent=1 // pred_fallthru
      _
    %38 = vsyncpa [#allocation3], 1
    %39 = vsyncpa [#allocation4], 1

</llo_original>
